<compile_context>
chip_gen: v7x
topology: tpu7x:2x2x1
jax: 0.10.0
libtpu: 0.0.40
codegen_flags: <defaults>
</compile_context>

<pallas_src>
import jax
import jax.numpy as jnp
from jax.experimental import pallas as pl
from jax.experimental.pallas import tpu as pltpu


def _round_up(x, m):
    return ((x + m - 1) // m) * m


def _cdiv(a, b):
    return (a + b - 1) // b


def _pick_tm(n):
    """Rows per grid step.

    Small n: one block covering all rows (rounded up to a multiple of 8).
    Large n: 128 (full (8,128) tiles, lane-dense stores), growing to 256/512
    only while >= 4 grid steps remain so the 'parallel' axis can shard across
    v7x's two TensorCores.
    """
    if n <= 128:
        return max(8, _round_up(n, 8))
    tm = 128
    for cand in (256, 512):
        if n >= cand * 4:
            tm = cand
    return tm


def _bigram_infer_kernel(tok_ref, table_ref, logits_ref):
    """Inference path: batched embedding lookup via one-hot MXU gather."""
    tm = tok_ref.shape[0]
    V = table_ref.shape[1]
    tok = tok_ref[...]                                            # (tm, 1) i32
    col = jax.lax.broadcasted_iota(jnp.int32, (tm, V), 1)         # (tm, V)
    onehot = (col == tok).astype(table_ref.dtype)                 # (tm, V)
    rows = jnp.dot(onehot, table_ref[...],
                   preferred_element_type=jnp.float32)            # MXU gather
    logits_ref[...] = rows.astype(logits_ref.dtype)


def _make_train_kernel(n_valid):
    """Training path kernel: gather + fused per-block cross-entropy partial."""

    def kernel(tok_ref, tgt_ref, table_ref, logits_ref, loss_ref):
        tm = tok_ref.shape[0]
        V = table_ref.shape[1]
        i = pl.program_id(0)

        tok = tok_ref[...]                                        # (tm, 1) i32
        tgt = tgt_ref[...]                                        # (tm, 1) i32
        col = jax.lax.broadcasted_iota(jnp.int32, (tm, V), 1)     # (tm, V)

        # Gather: bit-exact one-hot matmul against the VMEM-resident table.
        onehot = (col == tok).astype(table_ref.dtype)             # (tm, V)
        rows = jnp.dot(onehot, table_ref[...],
                       preferred_element_type=jnp.float32)        # (tm, V) f32
        logits_ref[...] = rows.astype(logits_ref.dtype)

        # Numerically-stable cross entropy on full (tm, V) vregs:
        #   loss_r = logsumexp(rows_r) - rows_r[tgt_r]
        m = jnp.max(rows, axis=-1, keepdims=True)                 # (tm, 1) XLU
        lse = jnp.log(jnp.sum(jnp.exp(rows - m), axis=-1,
                              keepdims=True)) + m                 # (tm, 1)
        tgt_logit = jnp.sum(jnp.where(col == tgt, rows, 0.0),
                            axis=-1, keepdims=True)               # (tm, 1)
        part = lse - tgt_logit                                    # (tm, 1)

        # Mask padded rows, reduce to a per-block sum, store it lane-dense
        # (full 128-lane unmasked vst; wrapper divides the total by N).
        row_id = i * tm + jax.lax.broadcasted_iota(jnp.int32, (tm, 1), 0)
        part = jnp.where(row_id < n_valid, part, 0.0)
        block_sum = jnp.sum(part, axis=0, keepdims=True)          # (1, 1)
        loss_ref[...] = jnp.broadcast_to(block_sum, (1, 128)).astype(jnp.float32)

    return kernel


def bigram_forward(token_index, embedding_table, targets=None):
    """Pallas implementation of BigramLanguageModel.forward.

    Args:
      token_index: (B, T) int32 token ids.
      embedding_table: (V, V) float32 embedding (== logits) table.
      targets: optional (B, T) int32 targets.

    Returns:
      (logits, loss): logits is (B*T, V) if targets given else (B, T, V);
      loss is a float32 scalar or None.
    """
    B, T = token_index.shape
    V = embedding_table.shape[-1]
    N = B * T

    tm = _pick_tm(N)
    nb = _cdiv(N, tm)
    n_pad = nb * tm

    tok = token_index.reshape(N).astype(jnp.int32)
    tok = jnp.pad(tok, (0, n_pad - N)).reshape(n_pad, 1)

    # Resident table: full-array block, constant index_map -> fetched once.
    table_spec = pl.BlockSpec((V, V), lambda i: (0, 0))
    tok_spec = pl.BlockSpec((tm, 1), lambda i: (i, 0))
    logits_spec = pl.BlockSpec((tm, V), lambda i: (i, 0))

    if targets is None:
        logits = pl.pallas_call(
            _bigram_infer_kernel,
            out_shape=jax.ShapeDtypeStruct((n_pad, V), embedding_table.dtype),
            grid=(nb,),
            in_specs=[tok_spec, table_spec],
            out_specs=logits_spec,
            compiler_params=pltpu.CompilerParams(
                dimension_semantics=("parallel",)),
        )(tok, embedding_table)
        return logits[:N].reshape(B, T, V), None

    tgt = targets.reshape(N).astype(jnp.int32)
    tgt = jnp.pad(tgt, (0, n_pad - N)).reshape(n_pad, 1)

    logits, loss_parts = pl.pallas_call(
        _make_train_kernel(N),
        out_shape=(
            jax.ShapeDtypeStruct((n_pad, V), embedding_table.dtype),
            jax.ShapeDtypeStruct((1, nb * 128), jnp.float32),
        ),
        grid=(nb,),
        in_specs=[tok_spec, tok_spec, table_spec],
        out_specs=(
            logits_spec,
            pl.BlockSpec((1, 128), lambda i: (0, i)),
        ),
        compiler_params=pltpu.CompilerParams(
            dimension_semantics=("parallel",)),
    )(tok, tgt, embedding_table)

    # Per-block sums -> mean (matches F.cross_entropy default reduction).
    block_sums = loss_parts.reshape(nb, 128)[:, 0]
    loss = jnp.sum(block_sums) / N
    return logits[:N], loss


if __name__ == "__main__":
    key = jax.random.PRNGKey(0)
    k_emb, k_tok, k_tgt = jax.random.split(key, 3)

    vocab_size = 128   # lane-aligned vocab (table fits VMEM: 64 KiB)
    B, T = 2, 8        # small batch / sequence

    # Deterministic "nn.Embedding(vocab, vocab)"-shaped table (~N(0,1) init).
    embedding_table = jax.random.normal(k_emb, (vocab_size, vocab_size),
                                        dtype=jnp.float32)
    token_index = jax.random.randint(k_tok, (B, T), 0, vocab_size,
                                     dtype=jnp.int32)
    targets = jax.random.randint(k_tgt, (B, T), 0, vocab_size,
                                 dtype=jnp.int32)

    # Training-style forward (with targets).
    logits, loss = bigram_forward(token_index, embedding_table, targets)
    logits = jax.block_until_ready(logits)
    loss = jax.block_until_ready(loss)

    # Pure-JAX reference check.
    ref_logits = embedding_table[token_index.reshape(-1)]
    ref_m = jnp.max(ref_logits, axis=-1)
    ref_lse = ref_m + jnp.log(jnp.sum(jnp.exp(ref_logits - ref_m[:, None]),
                                      axis=-1))
    ref_tgt = jnp.take_along_axis(ref_logits,
                                  targets.reshape(-1, 1), axis=-1)[:, 0]
    ref_loss = jnp.mean(ref_lse - ref_tgt)
    assert logits.shape == (B * T, vocab_size)
    assert jnp.allclose(logits, ref_logits, atol=1e-5, rtol=1e-5)
    assert jnp.allclose(loss, ref_loss, atol=1e-5, rtol=1e-5)

    # Inference-style forward (targets=None) — logits keep (B, T, V) shape.
    logits_no_tgt, loss_none = bigram_forward(token_index, embedding_table)
    logits_no_tgt = jax.block_until_ready(logits_no_tgt)
    assert logits_no_tgt.shape == (B, T, vocab_size)
    assert loss_none is None
    assert jnp.allclose(logits_no_tgt.reshape(B * T, vocab_size), ref_logits,
                        atol=1e-5, rtol=1e-5)

    # TODO(synk): generate() is an autoregressive host-side sampling loop
    # (torch.multinomial); sampling is host glue, not a kernel hot path.
    print("KERNEL_OK")
</pallas_src>

<mosaic_0001>
module attributes {stable_mosaic.version = 11 : i64} {
  func.func @kernel(%arg0: i32, %arg1: memref<16x1xi32, #tpu.memory_space<vmem>>, %arg2: memref<16x1xi32, #tpu.memory_space<vmem>>, %arg3: memref<128x128xf32, #tpu.memory_space<vmem>>, %arg4: memref<16x128xf32, #tpu.memory_space<vmem>>, %arg5: memref<1x128xf32, #tpu.memory_space<vmem>>) attributes {dimension_semantics = [#tpu.dimension_semantics<parallel>], iteration_bounds = array<i64: 1>, scalar_prefetch = 0 : i64, scratch_operands = 0 : i64, tpu.core_type = #tpu.core_type<tc>, window_params = [{transform_indices = @transform_0, window_bounds = array<i64: 16, 1>}, {transform_indices = @transform_1, window_bounds = array<i64: 16, 1>}, {pipeline_mode = #tpu.pipeline_mode<synchronous>, transform_indices = @transform_2, window_bounds = array<i64: 128, 128>}, {transform_indices = @transform_3, window_bounds = array<i64: 16, 128>}, {transform_indices = @transform_4, window_bounds = array<i64: 1, 128>}]} {
    %c0 = arith.constant 0 : index
    %c0_0 = arith.constant 0 : index
    %0 = vector.load %arg1[%c0, %c0_0] : memref<16x1xi32, #tpu.memory_space<vmem>>, vector<16x1xi32>
    %c0_1 = arith.constant 0 : index
    %c0_2 = arith.constant 0 : index
    %1 = vector.load %arg2[%c0_1, %c0_2] : memref<16x1xi32, #tpu.memory_space<vmem>>, vector<16x1xi32>
    %2 = tpu.iota {dimensions = array<i32: 1>} : vector<16x128xi32>
    %3 = vector.broadcast %0 : vector<16x1xi32> to vector<16x128xi32>
    %4 = arith.cmpi eq, %2, %3 : vector<16x128xi32>
    %5 = arith.extui %4 : vector<16x128xi1> to vector<16x128xi32>
    %6 = arith.sitofp %5 : vector<16x128xi32> to vector<16x128xf32>
    %c0_3 = arith.constant 0 : index
    %c0_4 = arith.constant 0 : index
    %7 = vector.load %arg3[%c0_3, %c0_4] : memref<128x128xf32, #tpu.memory_space<vmem>>, vector<128x128xf32>
    %cst = arith.constant dense<0.000000e+00> : vector<16x128xf32>
    %8 = tpu.matmul %6, %7, %cst {dimension_numbers = #tpu.dot_dimension_numbers<[1], [0], [0], [1], [0, 0, 1, 1], [], []>} : vector<16x128xf32>, vector<128x128xf32>, vector<16x128xf32> -> vector<16x128xf32>
    %c0_5 = arith.constant 0 : index
    %c0_6 = arith.constant 0 : index
    %9 = vector.load %arg4[%c0_5, %c0_6] : memref<16x128xf32, #tpu.memory_space<vmem>>, vector<16x128xf32>
    tpu.vector_store %arg4[%c0_5, %c0_6], %8 {strides = array<i32>} : memref<16x128xf32, #tpu.memory_space<vmem>>, vector<16x128xf32>,
    %cst_7 = arith.constant dense<0xFF800000> : vector<16xf32>
    %10 = vector.multi_reduction <maximumf>, %8, %cst_7 [1] : vector<16x128xf32> to vector<16xf32>
    %11 = vector.shape_cast %10 : vector<16xf32> to vector<16x1xf32>
    %12 = vector.broadcast %11 : vector<16x1xf32> to vector<16x128xf32>
    %13 = arith.subf %8, %12 : vector<16x128xf32>
    %14 = math.exp %13 : vector<16x128xf32>
    %cst_8 = arith.constant dense<0.000000e+00> : vector<16xf32>
    %15 = vector.multi_reduction <add>, %14, %cst_8 [1] : vector<16x128xf32> to vector<16xf32>
    %16 = vector.shape_cast %15 : vector<16xf32> to vector<16x1xf32>
    %17 = math.log %16 : vector<16x1xf32>
    %18 = arith.addf %17, %11 : vector<16x1xf32>
    %19 = vector.broadcast %1 : vector<16x1xi32> to vector<16x128xi32>
    %20 = arith.cmpi eq, %2, %19 : vector<16x128xi32>
    %cst_9 = arith.constant 0.000000e+00 : f32
    %21 = vector.broadcast %cst_9 : f32 to vector<16x128xf32>
    %22 = arith.select %20, %8, %21 : vector<16x128xi1>, vector<16x128xf32>
    %cst_10 = arith.constant dense<0.000000e+00> : vector<16xf32>
    %23 = vector.multi_reduction <add>, %22, %cst_10 [1] : vector<16x128xf32> to vector<16xf32>
    %24 = vector.shape_cast %23 : vector<16xf32> to vector<16x1xf32>
    %25 = arith.subf %18, %24 : vector<16x1xf32>
    %c16_i32 = arith.constant 16 : i32
    %26 = arith.muli %arg0, %c16_i32 : i32
    %27 = tpu.iota {dimensions = array<i32: 0>} : vector<16x1xi32>
    %28 = vector.broadcast %26 : i32 to vector<16x1xi32>
    %29 = arith.addi %28, %27 : vector<16x1xi32>
    %c16_i32_11 = arith.constant 16 : i32
    %30 = vector.broadcast %c16_i32_11 : i32 to vector<16x1xi32>
    %31 = arith.cmpi slt, %29, %30 : vector<16x1xi32>
    %cst_12 = arith.constant 0.000000e+00 : f32
    %32 = vector.broadcast %cst_12 : f32 to vector<16x1xf32>
    %33 = arith.select %31, %25, %32 : vector<16x1xi1>, vector<16x1xf32>
    %cst_13 = arith.constant dense<0.000000e+00> : vector<1xf32>
    %34 = vector.multi_reduction <add>, %33, %cst_13 [0] : vector<16x1xf32> to vector<1xf32>
    %35 = vector.shape_cast %34 : vector<1xf32> to vector<1x1xf32>
    %36 = vector.shape_cast %35 : vector<1x1xf32> to vector<1x1xf32>
    %37 = vector.broadcast %36 : vector<1x1xf32> to vector<1x128xf32>
    %c0_14 = arith.constant 0 : index
    %c0_15 = arith.constant 0 : index
    %38 = vector.load %arg5[%c0_14, %c0_15] : memref<1x128xf32, #tpu.memory_space<vmem>>, vector<1x128xf32>
    tpu.vector_store %arg5[%c0_14, %c0_15], %37 {strides = array<i32>} : memref<1x128xf32, #tpu.memory_space<vmem>>, vector<1x128xf32>,
    return
  }
  func.func @transform_0(%arg0: i32) -> (i32, i32) {
    %c0_i32 = arith.constant 0 : i32
    %c0_i32_0 = arith.constant 0 : i32
    return %arg0, %c0_i32 : i32, i32
  }
  func.func @transform_1(%arg0: i32) -> (i32, i32) {
    %c0_i32 = arith.constant 0 : i32
    %c0_i32_0 = arith.constant 0 : i32
    return %arg0, %c0_i32 : i32, i32
  }
  func.func @transform_2(%arg0: i32) -> (i32, i32) {
    %c0_i32 = arith.constant 0 : i32
    %c0_i32_0 = arith.constant 0 : i32
    %c0_i32_1 = arith.constant 0 : i32
    return %c0_i32, %c0_i32_0 : i32, i32
  }
  func.func @transform_3(%arg0: i32) -> (i32, i32) {
    %c0_i32 = arith.constant 0 : i32
    %c0_i32_0 = arith.constant 0 : i32
    return %arg0, %c0_i32 : i32, i32
  }
  func.func @transform_4(%arg0: i32) -> (i32, i32) {
    %c0_i32 = arith.constant 0 : i32
    %c0_i32_0 = arith.constant 0 : i32
    return %c0_i32, %arg0 : i32, i32
  }
}

</mosaic_0001>

<llo_original>
// kernel: tpu_custom_call.1
$region0: #{tpu_custom_call.1}
  #allocation0 [shape = 'u32[]', space=smem, size = 0x4, offset = 0x4, fixed_abs, tag = 'smem constant byte address 0x4 - core index']
  #allocation1 [shape = 'u32[144,128]{1,0:T(1,128)}', space=vmem, size = 0x12000, scoped, tag = 'internal scratch']
  %s0 = inlined_call_operand.vmem [shape: s32[16,1], index: 0, kind: input, shape index: {}]
  %s1 = inlined_call_operand.vmem [shape: s32[16,1], index: 1, kind: input, shape index: {}]
  %s2 = inlined_call_operand.hbm [shape: f32[128,128], index: 2, kind: input, shape index: {}]
  %s3 = inlined_call_operand.hbm [shape: f32[16,128], index: 3, kind: output, shape index: {0}]
  %s4 = inlined_call_operand.hbm [shape: f32[1,128], index: 4, kind: output, shape index: {1}]
  %5 = xla_tuple %s3, %s4
  %s6 = sld [smem:[#allocation0]]
  $region34: #{tpu_custom_call.1} parent=0
    _
  %s8 = ssub.s32 1, %s6
  %s9 = scalar_select 0, %s8, %s6
  $region1: #{tpu_custom_call.1} parent=0
    #allocation2 [shape = 'u8[65536]{0}', space=vmem, size = 0x10000, scoped, tag = 'input window, operand 2, single buffered']
    #allocation3 [shape = 's32[1]{0}', space=sflag, size = 0x4, scoped, tag = 'scoped memory for tpu_custom_call.1']
    #allocation4 [shape = 's32[1]{0}', space=sflag, size = 0x4, scoped, tag = 'scoped memory for tpu_custom_call.1']
    #allocation5 [shape = 'u8[8192]{0}', space=vmem, size = 0x2000, scoped, tag = 'output window, operand 0, single buffered']
    #allocation6 [shape = 'u8[512]{0}', space=vmem, size = 0x400, scoped, tag = 'output window, operand 1, single buffered']
    #allocation7 [shape = 's32[1]{0}', space=sflag, size = 0x4, scoped, tag = 'scoped memory for tpu_custom_call.1']
    %10 = vsyncpa [#allocation3], 0
    %11 = vsyncpa [#allocation4], 0
    %12 = vsyncpa [#allocation7], 0
    // Predicated region
    $region2: #{tpu_custom_call.1} parent=1 // pred_check
      _
    $region3: #{tpu_custom_call.1} parent=1 // pred_check_branch
      %14 = sbr.rel (0) target = $region5
    $region4: #{tpu_custom_call.1} parent=1 // pred_region
      _
    $region5: #{tpu_custom_call.1} parent=1 // pred_fallthru
      _
    // Predicated region
    $region6: #{tpu_custom_call.1} parent=1 // pred_check
      _
    $region7: #{tpu_custom_call.1} parent=1 // pred_check_branch
      %16 = sbr.rel (0) target = $region9
    $region8: #{tpu_custom_call.1} parent=1 // pred_region
      _
    $region9: #{tpu_custom_call.1} parent=1 // pred_fallthru
      _
    // Predicated region
    $region10: #{tpu_custom_call.1} parent=1 // pred_check
      _
    $region11: #{tpu_custom_call.1} parent=1 // pred_check_branch
      %18 = sbr.rel (0) target = $region13
    $region12: #{tpu_custom_call.1} parent=1 // pred_region
      %s20 = ssub.s32 2048, 2048
      %21 = vsyncadd [#allocation3], %s20
      %s22 = sshll.u32 [#allocation2], 4
      %s23 = int_to_ptr.vmem [resolvable:$true] %s22
      %28 = dma.hbm_to_vmem [thread:$0]  %s2, 2048, %s23, [#allocation3], 128, 128, 8
    $region13: #{tpu_custom_call.1} parent=1 // pred_fallthru
      _
    // Predicated region
    $region14: #{tpu_custom_call.1} parent=1 // pred_check
      _
    $region15: #{tpu_custom_call.1} parent=1 // pred_check_branch
      %30 = sbr.rel (0) target = $region17
    $region16: #{tpu_custom_call.1} parent=1 // pred_region
      %31 = dma.done [#allocation3], 2048
    $region17: #{tpu_custom_call.1} parent=1 // pred_fallthru
      _
    %v32 = vld [vmem:[%s0] sm:$0xff]
    %v33 = vld [vmem:[%s0 + $0x8] sm:$0xff]
    %v34 = vld [vmem:[%s1] sm:$0xff]
    %v35 = vld [vmem:[%s1 + $0x8] sm:$0xff]
    %v36 = vlaneseq
    %v37 = vand.u32 %v36, 127
    %38 = vset.pattern.permute.xlu0 0
    %39 = vperm.xlu0 %38, %v32
    %v40 = vpop.permute.xlu0 %39
    %41 = vset.pattern.permute.xlu0 0
    %42 = vperm.xlu0 %41, %v33
    %v43 = vpop.permute.xlu0 %42
    %vm44 = vcmp.eq.s32.totalorder %v37, %v40
    %vm45 = vcmp.eq.s32.totalorder %v37, %v43
    %v46 = vsel %vm44, 1, 0
    %v47 = vsel %vm45, 1, 0
    %v48 = vcvt.s32.f32 %v46
    %v49 = vcvt.s32.f32 %v47
    %v50 = vld [vmem:[#allocation2] sm:$0xff]
    %v51 = vld [vmem:[#allocation2 + $0x8] sm:$0xff]
    %v52 = vld [vmem:[#allocation2 + $0x10] sm:$0xff]
    %v53 = vld [vmem:[#allocation2 + $0x18] sm:$0xff]
    %v54 = vld [vmem:[#allocation2 + $0x20] sm:$0xff]
    %v55 = vld [vmem:[#allocation2 + $0x28] sm:$0xff]
    %v56 = vld [vmem:[#allocation2 + $0x30] sm:$0xff]
    %v57 = vld [vmem:[#allocation2 + $0x38] sm:$0xff]
    %v58 = vld [vmem:[#allocation2 + $0x40] sm:$0xff]
    %v59 = vld [vmem:[#allocation2 + $0x48] sm:$0xff]
    %v60 = vld [vmem:[#allocation2 + $0x50] sm:$0xff]
    %v61 = vld [vmem:[#allocation2 + $0x58] sm:$0xff]
    %v62 = vld [vmem:[#allocation2 + $0x60] sm:$0xff]
    %v63 = vld [vmem:[#allocation2 + $0x68] sm:$0xff]
    %v64 = vld [vmem:[#allocation2 + $0x70] sm:$0xff]
    %v65 = vld [vmem:[#allocation2 + $0x78] sm:$0xff]
    %66 = vmatprep.subr.mxu0 0.0
    %67 = vmatpush1.msra.mxu0 %v50
    %68 = vmatprep.subr.mxu0 0.0
    %69 = vmatpush1.msra.mxu0 %v51
    %70 = vmatprep.subr.mxu0 0.0
    %71 = vmatpush1.msra.mxu0 %v52
    %72 = vmatprep.subr.mxu0 0.0
    %73 = vmatpush1.msra.mxu0 %v53
    %74 = vmatprep.subr.mxu0 0.0
    %75 = vmatpush1.msra.mxu0 %v54
    %76 = vmatprep.subr.mxu0 0.0
    %77 = vmatpush1.msra.mxu0 %v55
    %78 = vmatprep.subr.mxu0 0.0
    %79 = vmatpush1.msra.mxu0 %v56
    %80 = vmatprep.subr.mxu0 0.0
    %81 = vmatpush1.msra.mxu0 %v57
    %82 = vmatprep.subr.mxu0 0.0
    %83 = vmatpush1.msra.mxu0 %v58
    %84 = vmatprep.subr.mxu0 0.0
    %85 = vmatpush1.msra.mxu0 %v59
    %86 = vmatprep.subr.mxu0 0.0
    %87 = vmatpush1.msra.mxu0 %v60
    %88 = vmatprep.subr.mxu0 0.0
    %89 = vmatpush1.msra.mxu0 %v61
    %90 = vmatprep.subr.mxu0 0.0
    %91 = vmatpush1.msra.mxu0 %v62
    %92 = vmatprep.subr.mxu0 0.0
    %93 = vmatpush1.msra.mxu0 %v63
    %94 = vmatprep.subr.mxu0 0.0
    %95 = vmatpush1.msra.mxu0 %v64
    %96 = vmatprep.subr.mxu0 0.0
    %97 = vmatpush1.msra.mxu0 %v65
    %98 = vmatprep.subr.mxu0 0.0
    %99 = vmatpush1.msra.mxu0 0.0
    %100 = vmatprep.subr.mxu0 0.0
    %101 = vmatpush1.msra.mxu0 0.0
    %102 = vmatprep.subr.mxu0 0.0
    %103 = vmatpush1.msra.mxu0 0.0
    %104 = vmatprep.subr.mxu0 0.0
    %105 = vmatpush1.msra.mxu0 0.0
    %106 = vmatprep.subr.mxu0 0.0
    %107 = vmatpush1.msra.mxu0 0.0
    %108 = vmatprep.subr.mxu0 0.0
    %109 = vmatpush1.msra.mxu0 0.0
    %110 = vmatprep.subr.mxu0 0.0
    %111 = vmatpush1.msra.mxu0 0.0
    %112 = vmatprep.subr.mxu0 0.0
    %113 = vmatpush1.msra.mxu0 0.0
    %114 = vmatprep.subr.mxu0 0.0
    %115 = vmatpush1.msra.mxu0 0.0
    %116 = vmatprep.subr.mxu0 0.0
    %117 = vmatpush1.msra.mxu0 0.0
    %118 = vmatprep.subr.mxu0 0.0
    %119 = vmatpush1.msra.mxu0 0.0
    %120 = vmatprep.subr.mxu0 0.0
    %121 = vmatpush1.msra.mxu0 0.0
    %122 = vmatprep.subr.mxu0 0.0
    %123 = vmatpush1.msra.mxu0 0.0
    %124 = vmatprep.subr.mxu0 0.0
    %125 = vmatpush1.msra.mxu0 0.0
    %126 = vmatprep.subr.mxu0 0.0
    %127 = vmatpush1.msra.mxu0 0.0
    %128 = vmatprep.subr.mxu0 0.0
    %129 = vmatpush1.msra.mxu0 0.0
    %130 = vmatprep.mubr.f32.mxu0 0.0
    %131 = vmatmul.mubr.f32.gmra.mrb[0].mxu0 %v48
    %v132 = vpop.f32.mrb[0].mxu0
    %v133 = vadd.f32 0.0, %v132
    %v134 = vpop.f32.mrb[0].mxu0
    %135 = vmatprep.mubr.f32.mxu0 0.0
    %136 = vmatmul.mubr.f32.gmra.mrb[0].mxu0 %v49
    %v137 = vpop.f32.mrb[0].mxu0
    %v138 = vadd.f32 0.0, %v137
    %v139 = vpop.f32.mrb[0].mxu0
    %140 = vdwg.mxu0
    %141 = vst [vmem:[#allocation5] sm:$0xff] %v133
    %142 = vst [vmem:[#allocation5 + $0x8] sm:$0xff] %v138
    %143 = vmax.xlane.f32.xlu0 %v133
    %v144 = vpop.xlane.xlu0 %143
    %145 = vmax.xlane.f32.xlu0 %v138
    %v146 = vpop.xlane.xlu0 %145
    %v147 = vsub.f32 %v133, %v144
    %v148 = vsub.f32 %v138, %v146
    %v149 = vmul.f32 %v147, 1.442695
    %v150 = vpow.pop %v149
    %v151 = vmul.f32 %v148, 1.442695
    %v152 = vpow.pop %v151
    %153 = vadd.xlane.f32.xlu0 %v150
    %v154 = vpop.xlane.xlu0 %153
    %155 = vadd.xlane.f32.xlu0 %v152
    %v156 = vpop.xlane.xlu0 %155
    %v157 = vlog2.pop %v154
    %v158 = vmul.f32 %v157, 0.6931472
    %v159 = vlog2.pop %v156
    %v160 = vmul.f32 %v159, 0.6931472
    %v161 = vadd.f32 %v158, %v144
    %v162 = vadd.f32 %v160, %v146
    %163 = vset.pattern.permute.xlu0 0
    %164 = vperm.xlu0 %163, %v34
    %v165 = vpop.permute.xlu0 %164
    %166 = vset.pattern.permute.xlu0 0
    %167 = vperm.xlu0 %166, %v35
    %v168 = vpop.permute.xlu0 %167
    %vm169 = vcmp.eq.s32.totalorder %v37, %v165
    %vm170 = vcmp.eq.s32.totalorder %v37, %v168
    %v171 = vsel %vm169, %v133, 0.0
    %v172 = vsel %vm170, %v138, 0.0
    %173 = vadd.xlane.f32.xlu0 %v171
    %v174 = vpop.xlane.xlu0 %173
    %175 = vadd.xlane.f32.xlu0 %v172
    %v176 = vpop.xlane.xlu0 %175
    %v177 = vsub.f32 %v161, %v174
    %v178 = vsub.f32 %v162, %v176
    %s179 = smul.u32 0, 16
    %v180 = vlaneseq
    %v181 = vshrl.u32 %v180, 7
    %v182 = vadd.s32 %v181, 8
    %v183 = vstv %s179
    %v184 = vadd.s32 %v183, %v181
    %v185 = vadd.s32 %v183, %v182
    %vm186 = vcmp.lt.s32.totalorder %v184, 16
    %vm187 = vcmp.lt.s32.totalorder %v185, 16
    %v188 = vsel %vm186, %v177, 0.0
    %v189 = vsel %vm187, %v178, 0.0
    %v190 = vadd.f32 %v188, %v189
    %v191 = vrot.slane %v190, 4
    %v192 = vadd.f32 %v190, %v191
    %v193 = vrot.slane %v192, 2
    %v194 = vadd.f32 %v192, %v193
    %v195 = vrot.slane %v194, 1
    %v196 = vadd.f32 %v194, %v195
    %197 = vst [vmem:[#allocation6] sm:$0x1] %v196
    // Predicated region
    $region18: #{tpu_custom_call.1} parent=1 // pred_check
      _
    $region19: #{tpu_custom_call.1} parent=1 // pred_check_branch
      %199 = sbr.rel (0) target = $region21
    $region20: #{tpu_custom_call.1} parent=1 // pred_region
      %s201 = ssub.s32 256, 256
      %202 = vsyncadd [#allocation4], %s201
      %s203 = sshll.u32 [#allocation5], 4
      %s204 = int_to_ptr.vmem [resolvable:$true] %s203
      %209 = dma.vmem_to_hbm [thread:$0]  %s204, 256, %s3, [#allocation4], 128, 128, 8
    $region21: #{tpu_custom_call.1} parent=1 // pred_fallthru
      _
    // Predicated region
    $region22: #{tpu_custom_call.1} parent=1 // pred_check
      _
    $region23: #{tpu_custom_call.1} parent=1 // pred_check_branch
      %211 = sbr.rel (0) target = $region25
    $region24: #{tpu_custom_call.1} parent=1 // pred_region
      %s213 = ssub.s32 16, 16
      %214 = vsyncadd [#allocation7], %s213
      %s216 = sshll.u32 [#allocation6], 4
      %s217 = int_to_ptr.vmem [resolvable:$true] %s216
      %219 = dma.vmem_to_hbm [thread:$0]  %s217, 16, %s4, [#allocation7]
    $region25: #{tpu_custom_call.1} parent=1 // pred_fallthru
      _
    // Predicated region
    $region26: #{tpu_custom_call.1} parent=1 // pred_check
      _
    $region27: #{tpu_custom_call.1} parent=1 // pred_check_branch
      %221 = sbr.rel (0) target = $region29
    $region28: #{tpu_custom_call.1} parent=1 // pred_region
      %222 = dma.done [#allocation4], 256
    $region29: #{tpu_custom_call.1} parent=1 // pred_fallthru
      _
    // Predicated region
    $region30: #{tpu_custom_call.1} parent=1 // pred_check
      _
    $region31: #{tpu_custom_call.1} parent=1 // pred_check_branch
      %224 = sbr.rel (0) target = $region33
    $region32: #{tpu_custom_call.1} parent=1 // pred_region
      %225 = dma.done [#allocation7], 16
    $region33: #{tpu_custom_call.1} parent=1 // pred_fallthru
      _
    %226 = vsyncpa [#allocation3], 1
    %227 = vsyncpa [#allocation4], 1
    %228 = vsyncpa [#allocation7], 1

</llo_original>
